<compile_context>
chip_gen: v6e
topology: v6e:2x2x1
jax: 0.10.0
libtpu: 0.0.40
codegen_flags: <defaults>
</compile_context>

<pallas_src>
import jax
import jax.numpy as jnp
from jax.experimental import pallas as pl
from jax.experimental.pallas import tpu as pltpu


def mlp_kernel(w1_ref, b1_ref, w2_ref, b2_ref, xt_ref, o_ref):
    # w1_ref: (8,)  flat torch weight W1[2,4] row-major (SMEM scalars)
    # b1_ref: (2,), w2_ref: (2,) flat W2[1,2], b2_ref: (1,)  (SMEM scalars)
    # xt_ref: (32, tile_c) f32 in VMEM; rows 8k..8k+7 = feature k over 8
    #         batch stripes.  o_ref: (8, tile_c) f32.
    x0 = xt_ref[0:8, :]      # feature 0, full (8, tile_c) vregs
    x1 = xt_ref[8:16, :]     # feature 1
    x2 = xt_ref[16:24, :]    # feature 2
    x3 = xt_ref[24:32, :]    # feature 3

    # Hidden layer: h_j = relu(sum_k x_k * W1[j,k] + b1[j])  -- pure VPU FMAs.
    h0 = (x0 * w1_ref[0] + x1 * w1_ref[1]
          + x2 * w1_ref[2] + x3 * w1_ref[3] + b1_ref[0])
    h0 = jnp.maximum(h0, 0.0)
    h1 = (x0 * w1_ref[4] + x1 * w1_ref[5]
          + x2 * w1_ref[6] + x3 * w1_ref[7] + b1_ref[1])
    h1 = jnp.maximum(h1, 0.0)

    # Output layer: z = h0*W2[0,0] + h1*W2[0,1] + b2; sigmoid on the EUP.
    z = h0 * w2_ref[0] + h1 * w2_ref[1] + b2_ref[0]
    o_ref[...] = jax.nn.sigmoid(z).astype(o_ref.dtype)


def _cdiv(a, b):
    return (a + b - 1) // b


def _round_up(a, b):
    return _cdiv(a, b) * b


def _pick_tile(n, max_tile_c):
    """Choose (tile_c, grid) in packed columns (8 batch elems per column)."""
    c_needed = _round_up(_cdiv(max(n, 1), 8), 128)   # lane-aligned columns
    if c_needed <= max_tile_c:
        if c_needed >= 4096:
            # Enough work: split so the parallel grid axis has >=2 steps
            # (shards across v7x's 2 TensorCores).
            tile_c = _round_up(_cdiv(c_needed, 2), 128)
        else:
            tile_c = c_needed
    else:
        tile_c = max_tile_c
    grid = _cdiv(c_needed, tile_c)
    return tile_c, grid


def mlp_forward_packed(xt, w1, b1, w2, b2, tile_c):
    """xt: (32, C) f32 packed slab, C a multiple of tile_c.  Returns (8, C)."""
    _, c = xt.shape
    assert c % tile_c == 0
    grid = c // tile_c
    n_elems = 8 * c
    cost = pl.CostEstimate(flops=22 * n_elems,
                           transcendentals=n_elems,
                           bytes_accessed=(32 + 8) * c * 4)
    return pl.pallas_call(
        mlp_kernel,
        out_shape=jax.ShapeDtypeStruct((8, c), jnp.float32),
        grid=(grid,),
        in_specs=[
            pl.BlockSpec(memory_space=pltpu.MemorySpace.SMEM),  # w1 flat (8,)
            pl.BlockSpec(memory_space=pltpu.MemorySpace.SMEM),  # b1 (2,)
            pl.BlockSpec(memory_space=pltpu.MemorySpace.SMEM),  # w2 flat (2,)
            pl.BlockSpec(memory_space=pltpu.MemorySpace.SMEM),  # b2 (1,)
            pl.BlockSpec((32, tile_c), lambda i: (0, i)),       # packed x tile
        ],
        out_specs=pl.BlockSpec((8, tile_c), lambda i: (0, i)),
        compiler_params=pltpu.CompilerParams(
            dimension_semantics=("parallel",)),
        cost_estimate=cost,
    )(
        w1.reshape(-1).astype(jnp.float32),
        b1.reshape(-1).astype(jnp.float32),
        w2.reshape(-1).astype(jnp.float32),
        b2.reshape(-1).astype(jnp.float32),
        xt,
    )


def mlp_forward(x, w1, b1, w2, b2, *, max_tile_c=32768):
    """x: (N, 4) f32.  w1: (2, 4), b1: (2,), w2: (1, 2), b2: (1,) (torch layout).

    Convenience wrapper that packs x into the lane/sublane-dense layout and
    unpacks the result.  Callers that can keep x resident in the packed
    (32, C) layout should call mlp_forward_packed directly and skip this
    staging (it costs an extra read+write of x).
    """
    n = x.shape[0]
    tile_c, grid = _pick_tile(n, max_tile_c)
    c = tile_c * grid
    n_pad = 8 * c

    # Pack: (n_pad, 4) -> (8 stripes, C, 4) -> (4, 8, C) -> (32, C).
    # Batch element b = stripe * C + column; row = feature * 8 + stripe.
    xp = jnp.zeros((n_pad, 4), jnp.float32).at[:n].set(x.astype(jnp.float32))
    xt = xp.reshape(8, c, 4).transpose(2, 0, 1).reshape(32, c)

    out = mlp_forward_packed(xt, w1, b1, w2, b2, tile_c)   # (8, C)

    # Unpack: out[s, col] is y for batch b = s*C + col.
    return out.reshape(n_pad)[:n].reshape(n, 1)


def init_params(key):
    # torch.nn.Linear-convention shapes: W1 (2, 4), b1 (2,), W2 (1, 2), b2 (1,)
    k1, k2, k3, k4 = jax.random.split(key, 4)
    bound1 = 1.0 / jnp.sqrt(4.0)
    bound2 = 1.0 / jnp.sqrt(2.0)
    w1 = jax.random.uniform(k1, (2, 4), jnp.float32, -bound1, bound1)
    b1 = jax.random.uniform(k2, (2,), jnp.float32, -bound1, bound1)
    w2 = jax.random.uniform(k3, (1, 2), jnp.float32, -bound2, bound2)
    b2 = jax.random.uniform(k4, (1,), jnp.float32, -bound2, bound2)
    return w1, b1, w2, b2


def _reference(x, w1, b1, w2, b2):
    h = jnp.maximum(x @ w1.T + b1, 0.0)
    return jax.nn.sigmoid(h @ w2.T + b2)


if __name__ == "__main__":
    key = jax.random.PRNGKey(0)
    kx, kx2, kp = jax.random.split(key, 3)

    w1, b1, w2, b2 = init_params(kp)

    # Small case (spec-sized batch).
    batch = 8
    x = jax.random.normal(kx, (batch, 4), jnp.float32)
    y = mlp_forward(x, w1, b1, w2, b2)
    jax.block_until_ready(y)
    y_ref = _reference(x, w1, b1, w2, b2)
    assert y.shape == (batch, 1)
    assert jnp.allclose(y, y_ref, atol=1e-6), "mismatch vs reference (small)"

    # Ragged case exercising sublane/lane packing + tail padding.
    batch2 = 300
    x2 = jax.random.normal(kx2, (batch2, 4), jnp.float32)
    y2 = mlp_forward(x2, w1, b1, w2, b2)
    jax.block_until_ready(y2)
    y2_ref = _reference(x2, w1, b1, w2, b2)
    assert y2.shape == (batch2, 1)
    assert jnp.allclose(y2, y2_ref, atol=1e-6), "mismatch vs reference (ragged)"

    print("KERNEL_OK")
</pallas_src>

<mosaic_0001>
module attributes {stable_mosaic.version = 11 : i64} {
  func.func @mlp_kernel(%arg0: i32, %arg1: memref<8xf32, #tpu.memory_space<smem>>, %arg2: memref<2xf32, #tpu.memory_space<smem>>, %arg3: memref<2xf32, #tpu.memory_space<smem>>, %arg4: memref<1xf32, #tpu.memory_space<smem>>, %arg5: memref<32x128xf32, #tpu.memory_space<vmem>>, %arg6: memref<8x128xf32, #tpu.memory_space<vmem>>) attributes {dimension_semantics = [#tpu.dimension_semantics<parallel>], iteration_bounds = array<i64: 1>, scalar_prefetch = 0 : i64, scratch_operands = 0 : i64, tpu.core_type = #tpu.core_type<tc>, window_params = [{transform_indices = @transform_0, window_bounds = array<i64: 8>}, {transform_indices = @transform_1, window_bounds = array<i64: 2>}, {transform_indices = @transform_2, window_bounds = array<i64: 2>}, {transform_indices = @transform_3, window_bounds = array<i64: 1>}, {transform_indices = @transform_4, window_bounds = array<i64: 32, 128>}, {transform_indices = @transform_5, window_bounds = array<i64: 8, 128>}]} {
    %c0 = arith.constant 0 : index
    %c0_0 = arith.constant 0 : index
    %0 = vector.load %arg5[%c0, %c0_0] : memref<32x128xf32, #tpu.memory_space<vmem>>, vector<8x128xf32>
    %c8 = arith.constant 8 : index
    %c0_1 = arith.constant 0 : index
    %1 = vector.load %arg5[%c8, %c0_1] : memref<32x128xf32, #tpu.memory_space<vmem>>, vector<8x128xf32>
    %c16 = arith.constant 16 : index
    %c0_2 = arith.constant 0 : index
    %2 = vector.load %arg5[%c16, %c0_2] : memref<32x128xf32, #tpu.memory_space<vmem>>, vector<8x128xf32>
    %c24 = arith.constant 24 : index
    %c0_3 = arith.constant 0 : index
    %3 = vector.load %arg5[%c24, %c0_3] : memref<32x128xf32, #tpu.memory_space<vmem>>, vector<8x128xf32>
    %c0_4 = arith.constant 0 : index
    %4 = memref.load %arg1[%c0_4] : memref<8xf32, #tpu.memory_space<smem>>
    %5 = vector.broadcast %4 : f32 to vector<8x128xf32>
    %6 = arith.mulf %0, %5 : vector<8x128xf32>
    %c1 = arith.constant 1 : index
    %7 = memref.load %arg1[%c1] : memref<8xf32, #tpu.memory_space<smem>>
    %8 = vector.broadcast %7 : f32 to vector<8x128xf32>
    %9 = arith.mulf %1, %8 : vector<8x128xf32>
    %10 = arith.addf %6, %9 : vector<8x128xf32>
    %c2 = arith.constant 2 : index
    %11 = memref.load %arg1[%c2] : memref<8xf32, #tpu.memory_space<smem>>
    %12 = vector.broadcast %11 : f32 to vector<8x128xf32>
    %13 = arith.mulf %2, %12 : vector<8x128xf32>
    %14 = arith.addf %10, %13 : vector<8x128xf32>
    %c3 = arith.constant 3 : index
    %15 = memref.load %arg1[%c3] : memref<8xf32, #tpu.memory_space<smem>>
    %16 = vector.broadcast %15 : f32 to vector<8x128xf32>
    %17 = arith.mulf %3, %16 : vector<8x128xf32>
    %18 = arith.addf %14, %17 : vector<8x128xf32>
    %c0_5 = arith.constant 0 : index
    %19 = memref.load %arg2[%c0_5] : memref<2xf32, #tpu.memory_space<smem>>
    %20 = vector.broadcast %19 : f32 to vector<8x128xf32>
    %21 = arith.addf %18, %20 : vector<8x128xf32>
    %cst = arith.constant 0.000000e+00 : f32
    %22 = vector.broadcast %cst : f32 to vector<8x128xf32>
    %23 = arith.maximumf %21, %22 : vector<8x128xf32>
    %c4 = arith.constant 4 : index
    %24 = memref.load %arg1[%c4] : memref<8xf32, #tpu.memory_space<smem>>
    %25 = vector.broadcast %24 : f32 to vector<8x128xf32>
    %26 = arith.mulf %0, %25 : vector<8x128xf32>
    %c5 = arith.constant 5 : index
    %27 = memref.load %arg1[%c5] : memref<8xf32, #tpu.memory_space<smem>>
    %28 = vector.broadcast %27 : f32 to vector<8x128xf32>
    %29 = arith.mulf %1, %28 : vector<8x128xf32>
    %30 = arith.addf %26, %29 : vector<8x128xf32>
    %c6 = arith.constant 6 : index
    %31 = memref.load %arg1[%c6] : memref<8xf32, #tpu.memory_space<smem>>
    %32 = vector.broadcast %31 : f32 to vector<8x128xf32>
    %33 = arith.mulf %2, %32 : vector<8x128xf32>
    %34 = arith.addf %30, %33 : vector<8x128xf32>
    %c7 = arith.constant 7 : index
    %35 = memref.load %arg1[%c7] : memref<8xf32, #tpu.memory_space<smem>>
    %36 = vector.broadcast %35 : f32 to vector<8x128xf32>
    %37 = arith.mulf %3, %36 : vector<8x128xf32>
    %38 = arith.addf %34, %37 : vector<8x128xf32>
    %c1_6 = arith.constant 1 : index
    %39 = memref.load %arg2[%c1_6] : memref<2xf32, #tpu.memory_space<smem>>
    %40 = vector.broadcast %39 : f32 to vector<8x128xf32>
    %41 = arith.addf %38, %40 : vector<8x128xf32>
    %cst_7 = arith.constant 0.000000e+00 : f32
    %42 = vector.broadcast %cst_7 : f32 to vector<8x128xf32>
    %43 = arith.maximumf %41, %42 : vector<8x128xf32>
    %c0_8 = arith.constant 0 : index
    %44 = memref.load %arg3[%c0_8] : memref<2xf32, #tpu.memory_space<smem>>
    %45 = vector.broadcast %44 : f32 to vector<8x128xf32>
    %46 = arith.mulf %23, %45 : vector<8x128xf32>
    %c1_9 = arith.constant 1 : index
    %47 = memref.load %arg3[%c1_9] : memref<2xf32, #tpu.memory_space<smem>>
    %48 = vector.broadcast %47 : f32 to vector<8x128xf32>
    %49 = arith.mulf %43, %48 : vector<8x128xf32>
    %50 = arith.addf %46, %49 : vector<8x128xf32>
    %c0_10 = arith.constant 0 : index
    %51 = memref.load %arg4[%c0_10] : memref<1xf32, #tpu.memory_space<smem>>
    %52 = vector.broadcast %51 : f32 to vector<8x128xf32>
    %53 = arith.addf %50, %52 : vector<8x128xf32>
    %54 = arith.negf %53 : vector<8x128xf32>
    %55 = math.exp %54 : vector<8x128xf32>
    %cst_11 = arith.constant 1.000000e+00 : f32
    %56 = vector.broadcast %cst_11 : f32 to vector<8x128xf32>
    %57 = arith.addf %56, %55 : vector<8x128xf32>
    %58 = arith.divf %56, %57 : vector<8x128xf32>
    %c0_12 = arith.constant 0 : index
    %c0_13 = arith.constant 0 : index
    %59 = vector.load %arg6[%c0_12, %c0_13] : memref<8x128xf32, #tpu.memory_space<vmem>>, vector<8x128xf32>
    tpu.vector_store %arg6[%c0_12, %c0_13], %58 {strides = array<i32>} : memref<8x128xf32, #tpu.memory_space<vmem>>, vector<8x128xf32>,
    return
  }
  func.func @transform_0(%arg0: i32) -> i32 {
    %c0_i32 = arith.constant 0 : i32
    %c0_i32_0 = arith.constant 0 : i32
    return %c0_i32 : i32
  }
  func.func @transform_1(%arg0: i32) -> i32 {
    %c0_i32 = arith.constant 0 : i32
    %c0_i32_0 = arith.constant 0 : i32
    return %c0_i32 : i32
  }
  func.func @transform_2(%arg0: i32) -> i32 {
    %c0_i32 = arith.constant 0 : i32
    %c0_i32_0 = arith.constant 0 : i32
    return %c0_i32 : i32
  }
  func.func @transform_3(%arg0: i32) -> i32 {
    %c0_i32 = arith.constant 0 : i32
    %c0_i32_0 = arith.constant 0 : i32
    return %c0_i32 : i32
  }
  func.func @transform_4(%arg0: i32) -> (i32, i32) {
    %c0_i32 = arith.constant 0 : i32
    %c0_i32_0 = arith.constant 0 : i32
    return %c0_i32, %arg0 : i32, i32
  }
  func.func @transform_5(%arg0: i32) -> (i32, i32) {
    %c0_i32 = arith.constant 0 : i32
    %c0_i32_0 = arith.constant 0 : i32
    return %c0_i32, %arg0 : i32, i32
  }
}

</mosaic_0001>

<llo_original>
// kernel: tpu_custom_call.1
$region0: #{tpu_custom_call.1}
  #allocation0 [shape = 'u32[]', space=smem, size = 0x4, offset = 0x4, fixed_abs, tag = 'smem constant byte address 0x4 - core index']
  #allocation1 [shape = 'u32[144,128]{1,0:T(1,128)}', space=vmem, size = 0x12000, scoped, tag = 'internal scratch']
  #allocation2 [shape = 'f32[1]{0:T(128)S(6)}', space=smem, size = 0x200, scoped, tag = 'scoped memory for tpu_custom_call.1']
  %s0 = inlined_call_operand.vmem [shape: f32[8], index: 0, kind: input, shape index: {}]
  %s1 = inlined_call_operand.vmem [shape: f32[2], index: 1, kind: input, shape index: {}]
  %s2 = inlined_call_operand.vmem [shape: f32[2], index: 2, kind: input, shape index: {}]
  %s3 = inlined_call_operand.<no memory space> [shape: f32[1], index: 3, kind: input, shape index: {}]
  %s4 = inlined_call_operand.hbm [shape: f32[32,128], index: 4, kind: input, shape index: {}]
  %s5 = inlined_call_operand.hbm [shape: f32[8,128], index: 5, kind: output, shape index: {}]
  %s6 = sld [smem:[#allocation0]]
  $region46: #{tpu_custom_call.1} parent=0
    _
  %s8 = ssub.s32 1, %s6
  %s9 = scalar_select 0, %s8, %s6
  %10 = sst [smem:[#allocation2]] %s3
  $region1: #{tpu_custom_call.1} parent=0
    #allocation3 [shape = 'u8[512]{0}', space=smem, size = 0x200, scoped, tag = 'input window, operand 0, single buffered']
    #allocation4 [shape = 's32[1]{0}', space=sflag, size = 0x4, scoped, tag = 'scoped memory for tpu_custom_call.1']
    #allocation5 [shape = 's32[1]{0}', space=sflag, size = 0x4, scoped, tag = 'scoped memory for tpu_custom_call.1']
    #allocation6 [shape = 's32[1]{0}', space=sflag, size = 0x4, scoped, tag = 'scoped memory for tpu_custom_call.1']
    #allocation7 [shape = 'u8[512]{0}', space=smem, size = 0x200, scoped, tag = 'input window, operand 1, single buffered']
    #allocation8 [shape = 's32[1]{0}', space=sflag, size = 0x4, scoped, tag = 'scoped memory for tpu_custom_call.1']
    #allocation9 [shape = 'u8[512]{0}', space=smem, size = 0x200, scoped, tag = 'input window, operand 2, single buffered']
    #allocation10 [shape = 'u8[16384]{0}', space=vmem, size = 0x4000, scoped, tag = 'input window, operand 4, single buffered']
    #allocation11 [shape = 'u8[4096]{0}', space=vmem, size = 0x1000, scoped, tag = 'output window, operand 0, single buffered']
    %11 = vsyncpa [#allocation6], 0
    %12 = vsyncpa [#allocation8], 0
    %13 = vsyncpa [#allocation4], 0
    %14 = vsyncpa [#allocation5], 0
    // Predicated region
    $region2: #{tpu_custom_call.1} parent=1 // pred_check
      _
    $region3: #{tpu_custom_call.1} parent=1 // pred_check_branch
      %16 = sbr.rel (0) target = $region5
    $region4: #{tpu_custom_call.1} parent=1 // pred_region
      %s18 = ssub.s32 16, 16
      %19 = vsyncadd [#allocation6], %s18
      %s21 = sshll.u32 %s0, 4
      %s22 = int_to_ptr.vmem [resolvable:$true] %s21
      %24 = dma.vmem_to_smem %s22, 16, [#allocation3], [#allocation6]
    $region5: #{tpu_custom_call.1} parent=1 // pred_fallthru
      _
    // Predicated region
    $region6: #{tpu_custom_call.1} parent=1 // pred_check
      _
    $region7: #{tpu_custom_call.1} parent=1 // pred_check_branch
      %26 = sbr.rel (0) target = $region9
    $region8: #{tpu_custom_call.1} parent=1 // pred_region
      %s28 = ssub.s32 16, 16
      %29 = vsyncadd [#allocation8], %s28
      %s31 = sshll.u32 %s1, 4
      %s32 = int_to_ptr.vmem [resolvable:$true] %s31
      %34 = dma.vmem_to_smem %s32, 16, [#allocation7], [#allocation8]
    $region9: #{tpu_custom_call.1} parent=1 // pred_fallthru
      _
    // Predicated region
    $region10: #{tpu_custom_call.1} parent=1 // pred_check
      _
    $region11: #{tpu_custom_call.1} parent=1 // pred_check_branch
      %36 = sbr.rel (0) target = $region13
    $region12: #{tpu_custom_call.1} parent=1 // pred_region
      %s38 = ssub.s32 16, 16
      %39 = vsyncadd [#allocation8], %s38
      %s41 = sshll.u32 %s2, 4
      %s42 = int_to_ptr.vmem [resolvable:$true] %s41
      %44 = dma.vmem_to_smem %s42, 16, [#allocation9], [#allocation8]
    $region13: #{tpu_custom_call.1} parent=1 // pred_fallthru
      _
    // Predicated region
    $region14: #{tpu_custom_call.1} parent=1 // pred_check
      _
    $region15: #{tpu_custom_call.1} parent=1 // pred_check_branch
      %46 = sbr.rel (0) target = $region17
    $region16: #{tpu_custom_call.1} parent=1 // pred_region
      _
    $region17: #{tpu_custom_call.1} parent=1 // pred_fallthru
      _
    // Predicated region
    $region18: #{tpu_custom_call.1} parent=1 // pred_check
      _
    $region19: #{tpu_custom_call.1} parent=1 // pred_check_branch
      %48 = sbr.rel (0) target = $region21
    $region20: #{tpu_custom_call.1} parent=1 // pred_region
      %s50 = ssub.s32 512, 512
      %51 = vsyncadd [#allocation4], %s50
      %s52 = sshll.u32 [#allocation10], 4
      %s53 = int_to_ptr.vmem [resolvable:$true] %s52
      %58 = dma.hbm_to_vmem [thread:$0]  %s4, 512, %s53, [#allocation4], 128, 128, 8
    $region21: #{tpu_custom_call.1} parent=1 // pred_fallthru
      _
    // Predicated region
    $region22: #{tpu_custom_call.1} parent=1 // pred_check
      _
    $region23: #{tpu_custom_call.1} parent=1 // pred_check_branch
      %60 = sbr.rel (0) target = $region25
    $region24: #{tpu_custom_call.1} parent=1 // pred_region
      %61 = dma.done [#allocation6], 16
    $region25: #{tpu_custom_call.1} parent=1 // pred_fallthru
      _
    // Predicated region
    $region26: #{tpu_custom_call.1} parent=1 // pred_check
      _
    $region27: #{tpu_custom_call.1} parent=1 // pred_check_branch
      %63 = sbr.rel (0) target = $region29
    $region28: #{tpu_custom_call.1} parent=1 // pred_region
      %64 = dma.done [#allocation8], 16
    $region29: #{tpu_custom_call.1} parent=1 // pred_fallthru
      _
    // Predicated region
    $region30: #{tpu_custom_call.1} parent=1 // pred_check
      _
    $region31: #{tpu_custom_call.1} parent=1 // pred_check_branch
      %66 = sbr.rel (0) target = $region33
    $region32: #{tpu_custom_call.1} parent=1 // pred_region
      %67 = dma.done [#allocation8], 16
    $region33: #{tpu_custom_call.1} parent=1 // pred_fallthru
      _
    // Predicated region
    $region34: #{tpu_custom_call.1} parent=1 // pred_check
      _
    $region35: #{tpu_custom_call.1} parent=1 // pred_check_branch
      %69 = sbr.rel (0) target = $region37
    $region36: #{tpu_custom_call.1} parent=1 // pred_region
      %70 = dma.done [#allocation4], 512
    $region37: #{tpu_custom_call.1} parent=1 // pred_fallthru
      _
    %71 = sfence
    %v72 = vld [vmem:[#allocation10] sm:$0xff]
    %v73 = vld [vmem:[#allocation10 + $0x8] sm:$0xff]
    %v74 = vld [vmem:[#allocation10 + $0x10] sm:$0xff]
    %v75 = vld [vmem:[#allocation10 + $0x18] sm:$0xff]
    %s76 = sld [smem:[#allocation3]]
    %v77 = vstv %s76
    %v78 = vmul.f32 %v72, %v77
    %s79 = sld [smem:[#allocation3 + $0x1]]
    %v80 = vstv %s79
    %v81 = vmul.f32 %v73, %v80
    %v82 = vadd.f32 %v78, %v81
    %s83 = sld [smem:[#allocation3 + $0x2]]
    %v84 = vstv %s83
    %v85 = vmul.f32 %v74, %v84
    %v86 = vadd.f32 %v82, %v85
    %s87 = sld [smem:[#allocation3 + $0x3]]
    %v88 = vstv %s87
    %v89 = vmul.f32 %v75, %v88
    %v90 = vadd.f32 %v86, %v89
    %s91 = sld [smem:[#allocation7]]
    %v92 = vstv %s91
    %v93 = vadd.f32 %v90, %v92
    %v94 = vmax.f32 %v93, 0.0
    %s95 = sld [smem:[#allocation3 + $0x4]]
    %v96 = vstv %s95
    %v97 = vmul.f32 %v72, %v96
    %s98 = sld [smem:[#allocation3 + $0x5]]
    %v99 = vstv %s98
    %v100 = vmul.f32 %v73, %v99
    %v101 = vadd.f32 %v97, %v100
    %s102 = sld [smem:[#allocation3 + $0x6]]
    %v103 = vstv %s102
    %v104 = vmul.f32 %v74, %v103
    %v105 = vadd.f32 %v101, %v104
    %s106 = sld [smem:[#allocation3 + $0x7]]
    %v107 = vstv %s106
    %v108 = vmul.f32 %v75, %v107
    %v109 = vadd.f32 %v105, %v108
    %s110 = sld [smem:[#allocation7 + $0x1]]
    %v111 = vstv %s110
    %v112 = vadd.f32 %v109, %v111
    %v113 = vmax.f32 %v112, 0.0
    %s114 = sld [smem:[#allocation9]]
    %v115 = vstv %s114
    %v116 = vmul.f32 %v94, %v115
    %s117 = sld [smem:[#allocation9 + $0x1]]
    %v118 = vstv %s117
    %v119 = vmul.f32 %v113, %v118
    %v120 = vadd.f32 %v116, %v119
    %s121 = sld [smem:[#allocation2]]
    %v122 = vstv %s121
    %v123 = vadd.f32 %v120, %v122
    %v124 = vxor.u32 %v123, 2147483648
    %v125 = vmul.f32 %v124, 1.442695
    %v126 = vpow.pop %v125
    %v127 = vadd.f32 %v126, 1.0
    %v128 = vrcp.pop %v127
    %v129 = vmul.f32 1.0, %v128
    %130 = vst [vmem:[#allocation11] sm:$0xff] %v129
    // Predicated region
    $region38: #{tpu_custom_call.1} parent=1 // pred_check
      _
    $region39: #{tpu_custom_call.1} parent=1 // pred_check_branch
      %132 = sbr.rel (0) target = $region41
    $region40: #{tpu_custom_call.1} parent=1 // pred_region
      %s134 = ssub.s32 128, 128
      %135 = vsyncadd [#allocation5], %s134
      %s137 = sshll.u32 [#allocation11], 4
      %s138 = int_to_ptr.vmem [resolvable:$true] %s137
      %140 = dma.vmem_to_hbm [thread:$0]  %s138, 128, %s5, [#allocation5]
    $region41: #{tpu_custom_call.1} parent=1 // pred_fallthru
      _
    // Predicated region
    $region42: #{tpu_custom_call.1} parent=1 // pred_check
      _
    $region43: #{tpu_custom_call.1} parent=1 // pred_check_branch
      %142 = sbr.rel (0) target = $region45
    $region44: #{tpu_custom_call.1} parent=1 // pred_region
      %143 = dma.done [#allocation5], 128
    $region45: #{tpu_custom_call.1} parent=1 // pred_fallthru
      _
    %144 = vsyncpa [#allocation4], 1
    %145 = vsyncpa [#allocation5], 1
    %146 = vsyncpa [#allocation6], 1
    %147 = vsyncpa [#allocation8], 1

</llo_original>
